<compile_context>
chip_gen: v7x
topology: tpu7x:2x2x1
jax: 0.10.0
libtpu: 0.0.40
codegen_flags: <defaults>
</compile_context>

<pallas_src>
import functools

import jax
import jax.numpy as jnp
from jax.experimental import pallas as pl
from jax.experimental.pallas import tpu as pltpu


# --------------------------------------------------------------------------
# Pallas kernel: one batch element per grid step, fully fused.
# --------------------------------------------------------------------------
def _channel_attention_kernel(x_ref, w1_ref, w2_ref, o_ref, *, inv_hw):
    """x_ref: (1, HW, C); w1_ref: (C, C//16); w2_ref: (C//16, C); o_ref: (1, 1, C)."""
    x = x_ref[0]                                                     # (HW, C), lane = C

    # AdaptiveAvgPool2d(1) / AdaptiveMaxPool2d(1): global pooling over HW.
    avg = jnp.sum(x, axis=0, keepdims=True) * jnp.float32(inv_hw)    # (1, C)
    mx = jnp.max(x, axis=0, keepdims=True)                           # (1, C)
    pooled = jnp.concatenate([avg, mx], axis=0)                      # (2, C)

    # Shared MLP: Conv2d(C, C//16, 1, bias=False) -> ReLU -> Conv2d(C//16, C, 1, bias=False)
    # Both branches share one pair of MXU matmuls via the stacked (2, C) LHS.
    h = jnp.dot(pooled, w1_ref[...], preferred_element_type=jnp.float32)   # (2, C//16)
    h = jnp.maximum(h, 0.0)
    y = jnp.dot(h, w2_ref[...], preferred_element_type=jnp.float32)        # (2, C)

    # out = sigmoid(fc(avg_pool(x)) + fc(max_pool(x)))
    s = y[0:1, :] + y[1:2, :]                                        # (1, C)
    sig = 1.0 / (1.0 + jnp.exp(-s))                                  # exp on EUP
    o_ref[...] = sig.reshape(1, 1, -1).astype(o_ref.dtype)


# --------------------------------------------------------------------------
# Wrapper
# --------------------------------------------------------------------------
def channel_attention(x, w1, w2):
    """x: (B, C, H, W) NCHW like PyTorch.
    w1: (C//16, C, 1, 1), w2: (C, C//16, 1, 1) (PyTorch Conv2d weights, bias=False).
    Returns (B, C, 1, 1) attention weights."""
    B, C, H, W = x.shape
    hidden = w1.shape[0]
    assert w1.shape == (hidden, C, 1, 1) and w2.shape == (C, hidden, 1, 1)

    # One-time layout plumbing in XLA: channel-last so the kernel sees a
    # lane-dense (HW, C) tile per batch element; 1x1-conv weights presented
    # as (in, out) matmul operands.
    x_cl = jnp.transpose(x, (0, 2, 3, 1)).reshape(B, H * W, C)
    w1t = jnp.transpose(w1.reshape(hidden, C))   # (C, hidden)
    w2t = jnp.transpose(w2.reshape(C, hidden))   # (hidden, C)

    out = pl.pallas_call(
        functools.partial(_channel_attention_kernel, inv_hw=1.0 / (H * W)),
        out_shape=jax.ShapeDtypeStruct((B, 1, C), jnp.float32),
        grid=(B,),
        in_specs=[
            pl.BlockSpec((1, H * W, C), lambda b: (b, 0, 0)),
            pl.BlockSpec((C, hidden), lambda b: (0, 0)),
            pl.BlockSpec((hidden, C), lambda b: (0, 0)),
        ],
        out_specs=pl.BlockSpec((1, 1, C), lambda b: (b, 0, 0)),
        compiler_params=pltpu.CompilerParams(
            dimension_semantics=("parallel",),
        ),
    )(x_cl, w1t, w2t)
    return out.reshape(B, C, 1, 1)


# --------------------------------------------------------------------------
# Pure-JAX reference (for in-script verification)
# --------------------------------------------------------------------------
def channel_attention_ref(x, w1, w2):
    B, C, H, W = x.shape
    hidden = w1.shape[0]
    w1m = w1.reshape(hidden, C)
    w2m = w2.reshape(C, hidden)

    def mlp(v):  # v: (B, C)
        return jnp.maximum(v @ w1m.T, 0.0) @ w2m.T

    avg = jnp.mean(x, axis=(2, 3))
    mx = jnp.max(x, axis=(2, 3))
    s = mlp(avg) + mlp(mx)
    return jax.nn.sigmoid(s).reshape(B, C, 1, 1)


# --------------------------------------------------------------------------
if __name__ == "__main__":
    key = jax.random.PRNGKey(0)
    kx, k1, k2 = jax.random.split(key, 3)

    # in_planes must be >= 16 (the module hard-codes in_planes // 16);
    # C = 128 also keeps the channel axis exactly one lane-width wide.
    B, C, H, W = 2, 128, 16, 16
    hidden = C // 16

    x = jax.random.normal(kx, (B, C, H, W), jnp.float32)
    w1 = 0.1 * jax.random.normal(k1, (hidden, C, 1, 1), jnp.float32)
    w2 = 0.1 * jax.random.normal(k2, (C, hidden, 1, 1), jnp.float32)

    out = jax.jit(channel_attention)(x, w1, w2)
    out = jax.block_until_ready(out)

    assert out.shape == (B, C, 1, 1)
    assert bool(jnp.all(jnp.isfinite(out)))
    assert bool(jnp.all((out >= 0.0) & (out <= 1.0)))

    ref = channel_attention_ref(x, w1, w2)
    assert bool(jnp.allclose(out, ref, atol=1e-5, rtol=1e-5))

    print("KERNEL_OK")
</pallas_src>

<mosaic_0001>
module attributes {stable_mosaic.version = 11 : i64} {
  func.func @_channel_attention_kernel(%arg0: i32, %arg1: memref<1x256x128xf32, #tpu.memory_space<vmem>>, %arg2: memref<128x8xf32, #tpu.memory_space<vmem>>, %arg3: memref<8x128xf32, #tpu.memory_space<vmem>>, %arg4: memref<1x1x128xf32, #tpu.memory_space<vmem>>) attributes {dimension_semantics = [#tpu.dimension_semantics<parallel>], iteration_bounds = array<i64: 2>, scalar_prefetch = 0 : i64, scratch_operands = 0 : i64, tpu.core_type = #tpu.core_type<tc>, window_params = [{transform_indices = @transform_0, window_bounds = array<i64: 1, 256, 128>}, {pipeline_mode = #tpu.pipeline_mode<synchronous>, transform_indices = @transform_1, window_bounds = array<i64: 128, 8>}, {pipeline_mode = #tpu.pipeline_mode<synchronous>, transform_indices = @transform_2, window_bounds = array<i64: 8, 128>}, {transform_indices = @transform_3, window_bounds = array<i64: 1, 1, 128>}]} {
    %c0 = arith.constant 0 : index
    %c0_0 = arith.constant 0 : index
    %c0_1 = arith.constant 0 : index
    %0 = vector.load %arg1[%c0, %c0_0, %c0_1] : memref<1x256x128xf32, #tpu.memory_space<vmem>>, vector<1x256x128xf32>
    %1 = vector.shape_cast %0 : vector<1x256x128xf32> to vector<256x128xf32>
    %cst = arith.constant dense<0.000000e+00> : vector<128xf32>
    %2 = vector.multi_reduction <add>, %1, %cst [0] : vector<256x128xf32> to vector<128xf32>
    %3 = vector.shape_cast %2 : vector<128xf32> to vector<1x128xf32>
    %cst_2 = arith.constant 3.906250e-03 : f32
    %4 = vector.broadcast %cst_2 : f32 to vector<1x128xf32>
    %5 = arith.mulf %3, %4 : vector<1x128xf32>
    %cst_3 = arith.constant dense<0xFF800000> : vector<128xf32>
    %6 = vector.multi_reduction <maximumf>, %1, %cst_3 [0] : vector<256x128xf32> to vector<128xf32>
    %7 = vector.shape_cast %6 : vector<128xf32> to vector<1x128xf32>
    %8 = tpu.concatenate %5, %7 in 0 : vector<1x128xf32>, vector<1x128xf32> -> vector<2x128xf32>
    %c0_4 = arith.constant 0 : index
    %c0_5 = arith.constant 0 : index
    %9 = vector.load %arg2[%c0_4, %c0_5] : memref<128x8xf32, #tpu.memory_space<vmem>>, vector<128x8xf32>
    %cst_6 = arith.constant dense<0.000000e+00> : vector<2x8xf32>
    %10 = tpu.matmul %8, %9, %cst_6 {dimension_numbers = #tpu.dot_dimension_numbers<[1], [0], [0], [1], [0, 0, 1, 1], [], []>} : vector<2x128xf32>, vector<128x8xf32>, vector<2x8xf32> -> vector<2x8xf32>
    %cst_7 = arith.constant 0.000000e+00 : f32
    %11 = vector.broadcast %cst_7 : f32 to vector<2x8xf32>
    %12 = arith.maximumf %10, %11 : vector<2x8xf32>
    %c0_8 = arith.constant 0 : index
    %c0_9 = arith.constant 0 : index
    %13 = vector.load %arg3[%c0_8, %c0_9] : memref<8x128xf32, #tpu.memory_space<vmem>>, vector<8x128xf32>
    %cst_10 = arith.constant dense<0.000000e+00> : vector<2x128xf32>
    %14 = tpu.matmul %12, %13, %cst_10 {dimension_numbers = #tpu.dot_dimension_numbers<[1], [0], [0], [1], [0, 0, 1, 1], [], []>} : vector<2x8xf32>, vector<8x128xf32>, vector<2x128xf32> -> vector<2x128xf32>
    %15 = vector.extract_strided_slice %14 {offsets = [0, 0], sizes = [1, 128], strides = [1, 1]} : vector<2x128xf32> to vector<1x128xf32>
    %16 = vector.extract_strided_slice %14 {offsets = [1, 0], sizes = [1, 128], strides = [1, 1]} : vector<2x128xf32> to vector<1x128xf32>
    %17 = arith.addf %15, %16 : vector<1x128xf32>
    %cst_11 = arith.constant 0.000000e+00 : f32
    %18 = vector.broadcast %cst_11 : f32 to vector<1x128xf32>
    %19 = arith.subf %18, %17 : vector<1x128xf32>
    %20 = math.exp %19 : vector<1x128xf32>
    %cst_12 = arith.constant 1.000000e+00 : f32
    %21 = vector.broadcast %cst_12 : f32 to vector<1x128xf32>
    %22 = arith.addf %21, %20 : vector<1x128xf32>
    %cst_13 = arith.constant 1.000000e+00 : f32
    %23 = vector.broadcast %cst_13 : f32 to vector<1x128xf32>
    %24 = arith.divf %23, %22 : vector<1x128xf32>
    %25 = vector.shape_cast %24 : vector<1x128xf32> to vector<1x1x128xf32>
    %c0_14 = arith.constant 0 : index
    %c0_15 = arith.constant 0 : index
    %c0_16 = arith.constant 0 : index
    %26 = vector.load %arg4[%c0_14, %c0_15, %c0_16] : memref<1x1x128xf32, #tpu.memory_space<vmem>>, vector<1x1x128xf32>
    tpu.vector_store %arg4[%c0_14, %c0_15, %c0_16], %25 {strides = array<i32>} : memref<1x1x128xf32, #tpu.memory_space<vmem>>, vector<1x1x128xf32>,
    return
  }
  func.func @transform_0(%arg0: i32) -> (i32, i32, i32) {
    %c0_i32 = arith.constant 0 : i32
    %c0_i32_0 = arith.constant 0 : i32
    %c0_i32_1 = arith.constant 0 : i32
    return %arg0, %c0_i32, %c0_i32_0 : i32, i32, i32
  }
  func.func @transform_1(%arg0: i32) -> (i32, i32) {
    %c0_i32 = arith.constant 0 : i32
    %c0_i32_0 = arith.constant 0 : i32
    %c0_i32_1 = arith.constant 0 : i32
    return %c0_i32, %c0_i32_0 : i32, i32
  }
  func.func @transform_2(%arg0: i32) -> (i32, i32) {
    %c0_i32 = arith.constant 0 : i32
    %c0_i32_0 = arith.constant 0 : i32
    %c0_i32_1 = arith.constant 0 : i32
    return %c0_i32, %c0_i32_0 : i32, i32
  }
  func.func @transform_3(%arg0: i32) -> (i32, i32, i32) {
    %c0_i32 = arith.constant 0 : i32
    %c0_i32_0 = arith.constant 0 : i32
    %c0_i32_1 = arith.constant 0 : i32
    return %arg0, %c0_i32, %c0_i32_0 : i32, i32, i32
  }
}

</mosaic_0001>

<llo_original>
// kernel: channel_attention.1
$region0: #{channel_attention.1}
  #allocation0 [shape = 'u32[]', space=smem, size = 0x4, offset = 0x4, fixed_abs, tag = 'smem constant byte address 0x4 - core index']
  #allocation1 [shape = 'u32[144,128]{1,0:T(1,128)}', space=vmem, size = 0x12000, scoped, tag = 'internal scratch']
  %s0 = inlined_call_operand.hbm [shape: f32[2,256,128], index: 0, kind: input, shape index: {}]
  %s1 = inlined_call_operand.vmem [shape: f32[128,8], index: 1, kind: input, shape index: {}]
  %s2 = inlined_call_operand.vmem [shape: f32[8,128], index: 2, kind: input, shape index: {}]
  %s3 = inlined_call_operand.hbm [shape: f32[2,1,128], index: 3, kind: output, shape index: {}]
  %s4 = sld [smem:[#allocation0]]
  $region49: #{channel_attention.1} parent=0
    _
  %s6 = ssub.s32 1, %s4
  %s7 = scalar_select 0, %s6, %s4
  $region1: #{channel_attention.1} parent=0
    #allocation2 [shape = 'u8[262144]{0}', space=vmem, size = 0x40000, scoped, tag = 'input window, operand 0']
    #allocation3 [shape = 's32[2]{0}', space=sflag, size = 0x8, scoped, tag = 'scoped memory for channel_attention.1']
    #allocation4 [shape = 's32[2]{0}', space=sflag, size = 0x8, scoped, tag = 'scoped memory for channel_attention.1']
    #allocation5 [shape = 'u8[1024]{0}', space=vmem, size = 0x400, scoped, tag = 'output window, operand 0']
    %8 = vsyncpa [#allocation3], 0
    %s9 = scalar_lea.sflag [#allocation3], 1
    %10 = vsyncpa %s9, 0
    %11 = vsyncpa [#allocation4], 0
    %s12 = scalar_lea.sflag [#allocation4], 1
    %13 = vsyncpa %s12, 0
    loop: start=0, step=1, limit=4
    $region2: #{channel_attention.1} parent=1 // loop_pre_header
      _
    $region3: #{channel_attention.1} parent=1 // loop_header
      %s15 = sphi 0, %s19
      %p16 = scmp.ge.s32.totalorder %s15, 4
      %s25 = sphi 0, %s27
      %s28 = sphi 0, %s25
      %s29 = sphi 0, %s28
      %s45 = sphi 0, %s29
      %s49 = sphi 0, %s49
      %s51 = sphi 0, %s49
      %s52 = sphi 0, %s51
      %s66 = sphi 0, %s52
      %s70 = sphi 0, %s70
      %s72 = sphi 0, %s70
      %s73 = sphi 0, %s72
      %s87 = sphi 0, %s73
      %s93 = sphi 0, %s95
      %s96 = sphi 0, %s93
      %s97 = sphi 0, %s96
      %s113 = sphi 0, %s97
    $region4: #{channel_attention.1} parent=1 // loop_header_branch
      %18 = sbr.rel (%p16) target = $region8
    $region5: #{channel_attention.1} parent=1 // loop_body
      %s20 = ssub.s32 %s15, 1
      %s21 = ssub.s32 %s15, 2
      %s22 = sadd.s32 %s15, 1
      %s23 = ssub.s32 %s15, %s22
      %p24 = scmp.eq.s32.totalorder %s23, 0
      %s26 = sadd.s32 %s25, 1
      %s27 = scalar_select %p24, %s25, %s26
      %p30 = pneg %p24
      %p31 = scmp.eq.s32.totalorder %s15, 1
      %p32 = por %p30, %p31
      %p33 = scmp.ne.s32.totalorder %s25, %s28
      %p34 = scmp.eq.s32.totalorder %s15, 0
      %p35 = por %p33, %p34
      %p36 = scmp.ne.s32.totalorder %s25, %s28
      %p37 = scmp.eq.s32.totalorder %s20, 1
      %p38 = por %p36, %p37
      %p39 = scmp.ne.s32.totalorder %s28, %s29
      %p40 = scmp.eq.s32.totalorder %s20, 0
      %p41 = por %p39, %p40
      %p42 = scmp.ne.s32.totalorder %s28, %s29
      %p43 = scmp.eq.s32.totalorder %s21, 1
      %p44 = por %p42, %p43
      %p46 = scmp.ne.s32.totalorder %s29, %s45
      %p47 = scmp.eq.s32.totalorder %s21, 0
      %p48 = por %p46, %p47
      %s50 = sadd.s32 %s49, 1
      %p53 = scmp.eq.s32.totalorder %s15, 1
      %p54 = scmp.ne.s32.totalorder %s49, %s51
      %p55 = scmp.eq.s32.totalorder %s15, 0
      %p56 = por %p54, %p55
      %p57 = scmp.ne.s32.totalorder %s49, %s51
      %p58 = scmp.eq.s32.totalorder %s20, 1
      %p59 = por %p57, %p58
      %p60 = scmp.ne.s32.totalorder %s51, %s52
      %p61 = scmp.eq.s32.totalorder %s20, 0
      %p62 = por %p60, %p61
      %p63 = scmp.ne.s32.totalorder %s51, %s52
      %p64 = scmp.eq.s32.totalorder %s21, 1
      %p65 = por %p63, %p64
      %p67 = scmp.ne.s32.totalorder %s52, %s66
      %p68 = scmp.eq.s32.totalorder %s21, 0
      %p69 = por %p67, %p68
      %s71 = sadd.s32 %s70, 1
      %p74 = scmp.eq.s32.totalorder %s15, 1
      %p75 = scmp.ne.s32.totalorder %s70, %s72
      %p76 = scmp.eq.s32.totalorder %s15, 0
      %p77 = por %p75, %p76
      %p78 = scmp.ne.s32.totalorder %s70, %s72
      %p79 = scmp.eq.s32.totalorder %s20, 1
      %p80 = por %p78, %p79
      %p81 = scmp.ne.s32.totalorder %s72, %s73
      %p82 = scmp.eq.s32.totalorder %s20, 0
      %p83 = por %p81, %p82
      %p84 = scmp.ne.s32.totalorder %s72, %s73
      %p85 = scmp.eq.s32.totalorder %s21, 1
      %p86 = por %p84, %p85
      %p88 = scmp.ne.s32.totalorder %s73, %s87
      %p89 = scmp.eq.s32.totalorder %s21, 0
      %p90 = por %p88, %p89
      %s91 = ssub.s32 %s15, %s22
      %p92 = scmp.eq.s32.totalorder %s91, 0
      %s94 = sadd.s32 %s93, 1
      %s95 = scalar_select %p92, %s93, %s94
      %p98 = pneg %p92
      %p99 = scmp.eq.s32.totalorder %s15, 1
      %p100 = por %p98, %p99
      %p101 = scmp.ne.s32.totalorder %s93, %s96
      %p102 = scmp.eq.s32.totalorder %s15, 0
      %p103 = por %p101, %p102
      %p104 = scmp.ne.s32.totalorder %s93, %s96
      %p105 = scmp.eq.s32.totalorder %s20, 1
      %p106 = por %p104, %p105
      %p107 = scmp.ne.s32.totalorder %s96, %s97
      %p108 = scmp.eq.s32.totalorder %s20, 0
      %p109 = por %p107, %p108
      %p110 = scmp.ne.s32.totalorder %s96, %s97
      %p111 = scmp.eq.s32.totalorder %s21, 1
      %p112 = por %p110, %p111
      %p114 = scmp.ne.s32.totalorder %s97, %s113
      %p115 = scmp.eq.s32.totalorder %s21, 0
      %p116 = por %p114, %p115
      %p117 = scmp.le.s32.totalorder 1, %s15
      %p118 = scmp.lt.s32.totalorder %s15, 3
      %p119 = pnand %p117, %p118
      %p120 = pneg %p119
      // Predicated region
      $region9: #{channel_attention.1} parent=5 // pred_check
        _
      $region10: #{channel_attention.1} parent=5 // pred_check_branch
        %122 = sbr.rel (%p119) target = $region12
      $region11: #{channel_attention.1} parent=5 // pred_region
        %s123 = ssub.s32 %s15, 1
        // Predicated region
        $region13: #{channel_attention.1} parent=11 // pred_check
          %p124 = pneg %p62
        $region14: #{channel_attention.1} parent=11 // pred_check_branch
          %126 = sbr.rel (%p124) target = $region16
        $region15: #{channel_attention.1} parent=11 // pred_region
          _
        $region16: #{channel_attention.1} parent=11 // pred_fallthru
          _
        // Predicated region
        $region17: #{channel_attention.1} parent=11 // pred_check
          %p127 = pneg %p83
        $region18: #{channel_attention.1} parent=11 // pred_check_branch
          %129 = sbr.rel (%p127) target = $region20
        $region19: #{channel_attention.1} parent=11 // pred_region
          _
        $region20: #{channel_attention.1} parent=11 // pred_fallthru
          _
      $region12: #{channel_attention.1} parent=5 // pred_fallthru
        _
      %p130 = scmp.lt.s32.totalorder %s15, 2
      // Predicated region
      $region21: #{channel_attention.1} parent=5 // pred_check
        %p131 = pneg %p130
      $region22: #{channel_attention.1} parent=5 // pred_check_branch
        %133 = sbr.rel (%p131) target = $region24
      $region23: #{channel_attention.1} parent=5 // pred_region
        // Predicated region
        $region25: #{channel_attention.1} parent=23 // pred_check
          %p134 = pneg %p35
        $region26: #{channel_attention.1} parent=23 // pred_check_branch
          %136 = sbr.rel (%p134) target = $region28
        $region27: #{channel_attention.1} parent=23 // pred_region
          %s137 = sand.u32 %s25, 1
          %s138 = scalar_lea.sflag [#allocation3], %s137
          %s139 = sand.u32 %s25, 1
          %s140 = smul.addr %s139, 256
          %s141 = scalar_lea.vmem [#allocation2], %s140
          %s143 = ssub.s32 4096, 4096
          %144 = vsyncadd %s138, %s143
          %s145 = smul.addr %s15, 32
          %s146 = smul.addr %s145, 128
          %s147 = scalar_lea.hbm %s0, %s146
          %s148 = sshll.u32 %s141, 4
          %s149 = int_to_ptr.vmem [resolvable:$true] %s148
          %154 = dma.hbm_to_vmem [thread:$0]  %s147, 4096, %s149, %s138, 128, 128, 8
        $region28: #{channel_attention.1} parent=23 // pred_fallthru
          _
      $region24: #{channel_attention.1} parent=5 // pred_fallthru
        _
      %p155 = scmp.le.s32.totalorder 1, %s15
      %p156 = scmp.lt.s32.totalorder %s15, 3
      %p157 = pnand %p155, %p156
      %p158 = pneg %p157
      // Predicated region
      $region29: #{channel_attention.1} parent=5 // pred_check
        _
      $region30: #{channel_attention.1} parent=5 // pred_check_branch
        %160 = sbr.rel (%p157) target = $region32
      $region31: #{channel_attention.1} parent=5 // pred_region
        %s161 = ssub.s32 %s15, 1
        %s162 = sand.u32 %s28, 1
        %s163 = scalar_lea.sflag [#allocation3], %s162
        %s164 = sand.u32 %s28, 1
        %s165 = smul.addr %s164, 256
        %s166 = scalar_lea.vmem [#allocation2], %s165
        // Predicated region
        $region33: #{channel_attention.1} parent=31 // pred_check
          %p167 = pneg %p41
        $region34: #{channel_attention.1} parent=31 // pred_check_branch
          %169 = sbr.rel (%p167) target = $region36
        $region35: #{channel_attention.1} parent=31 // pred_region
          %170 = dma.done %s163, 4096
        $region36: #{channel_attention.1} parent=31 // pred_fallthru
          _
        %s171 = sand.u32 %s28, 1
        %s172 = scalar_lea.sflag [#allocation3], %s171
        %s173 = sand.u32 %s28, 1
        %s174 = smul.addr %s173, 256
        %s175 = scalar_lea.vmem [#allocation2], %s174
        %p176 = pneg %p41
        %p177 = pneg %p38
        %p178 = pneg %p62
        %p179 = pneg %p59
        %p180 = pneg %p83
        %p181 = pneg %p80
        %p182 = pneg %p109
        %p183 = pneg %p106
        %s184 = sand.u32 %s96, 1
        %s185 = scalar_lea.sflag [#allocation4], %s184
        %s186 = sand.u32 %s96, 1
        %s187 = scalar_lea.vmem [#allocation5], %s186
        %v188 = vld [vmem:[%s166] sm:$0xff]
        %v189 = vld [vmem:[%s166 + $0x8] sm:$0xff]
        %v190 = vld [vmem:[%s166 + $0x10] sm:$0xff]
        %v191 = vld [vmem:[%s166 + $0x18] sm:$0xff]
        %v192 = vld [vmem:[%s166 + $0x20] sm:$0xff]
        %v193 = vld [vmem:[%s166 + $0x28] sm:$0xff]
        %v194 = vld [vmem:[%s166 + $0x30] sm:$0xff]
        %v195 = vld [vmem:[%s166 + $0x38] sm:$0xff]
        %v196 = vld [vmem:[%s166 + $0x40] sm:$0xff]
        %v197 = vld [vmem:[%s166 + $0x48] sm:$0xff]
        %v198 = vld [vmem:[%s166 + $0x50] sm:$0xff]
        %v199 = vld [vmem:[%s166 + $0x58] sm:$0xff]
        %v200 = vld [vmem:[%s166 + $0x60] sm:$0xff]
        %v201 = vld [vmem:[%s166 + $0x68] sm:$0xff]
        %v202 = vld [vmem:[%s166 + $0x70] sm:$0xff]
        %v203 = vld [vmem:[%s166 + $0x78] sm:$0xff]
        %v204 = vld [vmem:[%s166 + $0x80] sm:$0xff]
        %v205 = vld [vmem:[%s166 + $0x88] sm:$0xff]
        %v206 = vld [vmem:[%s166 + $0x90] sm:$0xff]
        %v207 = vld [vmem:[%s166 + $0x98] sm:$0xff]
        %v208 = vld [vmem:[%s166 + $0xa0] sm:$0xff]
        %v209 = vld [vmem:[%s166 + $0xa8] sm:$0xff]
        %v210 = vld [vmem:[%s166 + $0xb0] sm:$0xff]
        %v211 = vld [vmem:[%s166 + $0xb8] sm:$0xff]
        %v212 = vld [vmem:[%s166 + $0xc0] sm:$0xff]
        %v213 = vld [vmem:[%s166 + $0xc8] sm:$0xff]
        %v214 = vld [vmem:[%s166 + $0xd0] sm:$0xff]
        %v215 = vld [vmem:[%s166 + $0xd8] sm:$0xff]
        %v216 = vld [vmem:[%s166 + $0xe0] sm:$0xff]
        %v217 = vld [vmem:[%s166 + $0xe8] sm:$0xff]
        %v218 = vld [vmem:[%s166 + $0xf0] sm:$0xff]
        %v219 = vld [vmem:[%s166 + $0xf8] sm:$0xff]
        %v220 = vadd.f32 %v188, %v189
        %v221 = vadd.f32 %v220, %v190
        %v222 = vadd.f32 %v221, %v191
        %v223 = vadd.f32 %v222, %v192
        %v224 = vadd.f32 %v223, %v193
        %v225 = vadd.f32 %v224, %v194
        %v226 = vadd.f32 %v225, %v195
        %v227 = vadd.f32 %v226, %v196
        %v228 = vadd.f32 %v227, %v197
        %v229 = vadd.f32 %v228, %v198
        %v230 = vadd.f32 %v229, %v199
        %v231 = vadd.f32 %v230, %v200
        %v232 = vadd.f32 %v231, %v201
        %v233 = vadd.f32 %v232, %v202
        %v234 = vadd.f32 %v233, %v203
        %v235 = vadd.f32 %v234, %v204
        %v236 = vadd.f32 %v235, %v205
        %v237 = vadd.f32 %v236, %v206
        %v238 = vadd.f32 %v237, %v207
        %v239 = vadd.f32 %v238, %v208
        %v240 = vadd.f32 %v239, %v209
        %v241 = vadd.f32 %v240, %v210
        %v242 = vadd.f32 %v241, %v211
        %v243 = vadd.f32 %v242, %v212
        %v244 = vadd.f32 %v243, %v213
        %v245 = vadd.f32 %v244, %v214
        %v246 = vadd.f32 %v245, %v215
        %v247 = vadd.f32 %v246, %v216
        %v248 = vadd.f32 %v247, %v217
        %v249 = vadd.f32 %v248, %v218
        %v250 = vadd.f32 %v249, %v219
        %v251 = vrot.slane %v250, 4
        %v252 = vadd.f32 %v250, %v251
        %v253 = vrot.slane %v252, 2
        %v254 = vadd.f32 %v252, %v253
        %v255 = vrot.slane %v254, 1
        %v256 = vadd.f32 %v254, %v255
        %v257 = vmul.f32 %v256, 0.00390625
        %v258 = vmax.f32 %v188, %v192
        %v259 = vmax.f32 %v189, %v193
        %v260 = vmax.f32 %v190, %v194
        %v261 = vmax.f32 %v191, %v195
        %v262 = vmax.f32 %v258, %v196
        %v263 = vmax.f32 %v259, %v197
        %v264 = vmax.f32 %v260, %v198
        %v265 = vmax.f32 %v261, %v199
        %v266 = vmax.f32 %v262, %v200
        %v267 = vmax.f32 %v263, %v201
        %v268 = vmax.f32 %v264, %v202
        %v269 = vmax.f32 %v265, %v203
        %v270 = vmax.f32 %v266, %v204
        %v271 = vmax.f32 %v267, %v205
        %v272 = vmax.f32 %v268, %v206
        %v273 = vmax.f32 %v269, %v207
        %v274 = vmax.f32 %v270, %v208
        %v275 = vmax.f32 %v271, %v209
        %v276 = vmax.f32 %v272, %v210
        %v277 = vmax.f32 %v273, %v211
        %v278 = vmax.f32 %v274, %v212
        %v279 = vmax.f32 %v275, %v213
        %v280 = vmax.f32 %v276, %v214
        %v281 = vmax.f32 %v277, %v215
        %v282 = vmax.f32 %v278, %v216
        %v283 = vmax.f32 %v279, %v217
        %v284 = vmax.f32 %v280, %v218
        %v285 = vmax.f32 %v281, %v219
        %v286 = vmax.f32 %v282, %v283
        %v287 = vmax.f32 %v284, %v285
        %v288 = vmax.f32 %v286, %v287
        %v289 = vrot.slane %v288, 4
        %v290 = vmax.f32 %v288, %v289
        %v291 = vrot.slane %v290, 2
        %v292 = vmax.f32 %v290, %v291
        %v293 = vrot.slane %v292, 1
        %v294 = vmax.f32 %v292, %v293
        %vm295 = vcmask 1040384
        %v296 = vsel %vm295, %v257, %v294
        %v297 = vld [vmem:[%s1] sm:$0xff]
        %v298 = vld [vmem:[%s1 + $0x8] sm:$0xff]
        %v299 = vld [vmem:[%s1 + $0x10] sm:$0xff]
        %v300 = vld [vmem:[%s1 + $0x18] sm:$0xff]
        %v301 = vld [vmem:[%s1 + $0x20] sm:$0xff]
        %v302 = vld [vmem:[%s1 + $0x28] sm:$0xff]
        %v303 = vld [vmem:[%s1 + $0x30] sm:$0xff]
        %v304 = vld [vmem:[%s1 + $0x38] sm:$0xff]
        %v305 = vld [vmem:[%s1 + $0x40] sm:$0xff]
        %v306 = vld [vmem:[%s1 + $0x48] sm:$0xff]
        %v307 = vld [vmem:[%s1 + $0x50] sm:$0xff]
        %v308 = vld [vmem:[%s1 + $0x58] sm:$0xff]
        %v309 = vld [vmem:[%s1 + $0x60] sm:$0xff]
        %v310 = vld [vmem:[%s1 + $0x68] sm:$0xff]
        %v311 = vld [vmem:[%s1 + $0x70] sm:$0xff]
        %v312 = vld [vmem:[%s1 + $0x78] sm:$0xff]
        %313 = vmatprep.subr.mxu0 0.0
        %314 = vmatpush1.msra.mxu0 %v297
        %315 = vmatprep.subr.mxu0 0.0
        %316 = vmatpush1.msra.mxu0 %v298
        %317 = vmatprep.subr.mxu0 0.0
        %318 = vmatpush1.msra.mxu0 %v299
        %319 = vmatprep.subr.mxu0 0.0
        %320 = vmatpush1.msra.mxu0 %v300
        %321 = vmatprep.subr.mxu0 0.0
        %322 = vmatpush1.msra.mxu0 %v301
        %323 = vmatprep.subr.mxu0 0.0
        %324 = vmatpush1.msra.mxu0 %v302
        %325 = vmatprep.subr.mxu0 0.0
        %326 = vmatpush1.msra.mxu0 %v303
        %327 = vmatprep.subr.mxu0 0.0
        %328 = vmatpush1.msra.mxu0 %v304
        %329 = vmatprep.subr.mxu0 0.0
        %330 = vmatpush1.msra.mxu0 %v305
        %331 = vmatprep.subr.mxu0 0.0
        %332 = vmatpush1.msra.mxu0 %v306
        %333 = vmatprep.subr.mxu0 0.0
        %334 = vmatpush1.msra.mxu0 %v307
        %335 = vmatprep.subr.mxu0 0.0
        %336 = vmatpush1.msra.mxu0 %v308
        %337 = vmatprep.subr.mxu0 0.0
        %338 = vmatpush1.msra.mxu0 %v309
        %339 = vmatprep.subr.mxu0 0.0
        %340 = vmatpush1.msra.mxu0 %v310
        %341 = vmatprep.subr.mxu0 0.0
        %342 = vmatpush1.msra.mxu0 %v311
        %343 = vmatprep.subr.mxu0 0.0
        %344 = vmatpush1.msra.mxu0 %v312
        %345 = vmatprep.subr.mxu0 0.0
        %346 = vmatpush1.msra.mxu0 0.0
        %347 = vmatprep.subr.mxu0 0.0
        %348 = vmatpush1.msra.mxu0 0.0
        %349 = vmatprep.subr.mxu0 0.0
        %350 = vmatpush1.msra.mxu0 0.0
        %351 = vmatprep.subr.mxu0 0.0
        %352 = vmatpush1.msra.mxu0 0.0
        %353 = vmatprep.subr.mxu0 0.0
        %354 = vmatpush1.msra.mxu0 0.0
        %355 = vmatprep.subr.mxu0 0.0
        %356 = vmatpush1.msra.mxu0 0.0
        %357 = vmatprep.subr.mxu0 0.0
        %358 = vmatpush1.msra.mxu0 0.0
        %359 = vmatprep.subr.mxu0 0.0
        %360 = vmatpush1.msra.mxu0 0.0
        %361 = vmatprep.subr.mxu0 0.0
        %362 = vmatpush1.msra.mxu0 0.0
        %363 = vmatprep.subr.mxu0 0.0
        %364 = vmatpush1.msra.mxu0 0.0
        %365 = vmatprep.subr.mxu0 0.0
        %366 = vmatpush1.msra.mxu0 0.0
        %367 = vmatprep.subr.mxu0 0.0
        %368 = vmatpush1.msra.mxu0 0.0
        %369 = vmatprep.subr.mxu0 0.0
        %370 = vmatpush1.msra.mxu0 0.0
        %371 = vmatprep.subr.mxu0 0.0
        %372 = vmatpush1.msra.mxu0 0.0
        %373 = vmatprep.subr.mxu0 0.0
        %374 = vmatpush1.msra.mxu0 0.0
        %375 = vmatprep.subr.mxu0 0.0
        %376 = vmatpush1.msra.mxu0 0.0
        %377 = vmatprep.mubr.f32.mxu0 0.0
        %378 = vmatmul.mubr.f32.gmra.mrb[0].mxu0 %v296
        %v379 = vpop.f32.mrb[0].mxu0
        %v380 = vadd.f32 0.0, %v379
        %v381 = vpop.f32.mrb[0].mxu0
        %382 = vdwg.mxu0
        %v383 = vmax.f32 %v380, 0.0
        %v384 = vld [vmem:[%s2] sm:$0xff]
        %vm385 = vcmask 64512
        %v387 = vsel %vm385, %v383, 0
        %389 = vmatprep.subr.mxu0 0.0
        %390 = vmatpush1.msra.mxu0 %v384
        %391 = vmatprep.subr.mxu0 0.0
        %392 = vmatpush1.msra.mxu0 0.0
        %393 = vmatprep.subr.mxu0 0.0
        %394 = vmatpush1.msra.mxu0 0.0
        %395 = vmatprep.subr.mxu0 0.0
        %396 = vmatpush1.msra.mxu0 0.0
        %397 = vmatprep.subr.mxu0 0.0
        %398 = vmatpush1.msra.mxu0 0.0
        %399 = vmatprep.subr.mxu0 0.0
        %400 = vmatpush1.msra.mxu0 0.0
        %401 = vmatprep.subr.mxu0 0.0
        %402 = vmatpush1.msra.mxu0 0.0
        %403 = vmatprep.subr.mxu0 0.0
        %404 = vmatpush1.msra.mxu0 0.0
        %405 = vmatprep.subr.mxu0 0.0
        %406 = vmatpush1.msra.mxu0 0.0
        %407 = vmatprep.subr.mxu0 0.0
        %408 = vmatpush1.msra.mxu0 0.0
        %409 = vmatprep.subr.mxu0 0.0
        %410 = vmatpush1.msra.mxu0 0.0
        %411 = vmatprep.subr.mxu0 0.0
        %412 = vmatpush1.msra.mxu0 0.0
        %413 = vmatprep.subr.mxu0 0.0
        %414 = vmatpush1.msra.mxu0 0.0
        %415 = vmatprep.subr.mxu0 0.0
        %416 = vmatpush1.msra.mxu0 0.0
        %417 = vmatprep.subr.mxu0 0.0
        %418 = vmatpush1.msra.mxu0 0.0
        %419 = vmatprep.subr.mxu0 0.0
        %420 = vmatpush1.msra.mxu0 0.0
        %421 = vmatprep.subr.mxu0 0.0
        %422 = vmatpush1.msra.mxu0 0.0
        %423 = vmatprep.subr.mxu0 0.0
        %424 = vmatpush1.msra.mxu0 0.0
        %425 = vmatprep.subr.mxu0 0.0
        %426 = vmatpush1.msra.mxu0 0.0
        %427 = vmatprep.subr.mxu0 0.0
        %428 = vmatpush1.msra.mxu0 0.0
        %429 = vmatprep.subr.mxu0 0.0
        %430 = vmatpush1.msra.mxu0 0.0
        %431 = vmatprep.subr.mxu0 0.0
        %432 = vmatpush1.msra.mxu0 0.0
        %433 = vmatprep.subr.mxu0 0.0
        %434 = vmatpush1.msra.mxu0 0.0
        %435 = vmatprep.subr.mxu0 0.0
        %436 = vmatpush1.msra.mxu0 0.0
        %437 = vmatprep.subr.mxu0 0.0
        %438 = vmatpush1.msra.mxu0 0.0
        %439 = vmatprep.subr.mxu0 0.0
        %440 = vmatpush1.msra.mxu0 0.0
        %441 = vmatprep.subr.mxu0 0.0
        %442 = vmatpush1.msra.mxu0 0.0
        %443 = vmatprep.subr.mxu0 0.0
        %444 = vmatpush1.msra.mxu0 0.0
        %445 = vmatprep.subr.mxu0 0.0
        %446 = vmatpush1.msra.mxu0 0.0
        %447 = vmatprep.subr.mxu0 0.0
        %448 = vmatpush1.msra.mxu0 0.0
        %449 = vmatprep.subr.mxu0 0.0
        %450 = vmatpush1.msra.mxu0 0.0
        %451 = vmatprep.subr.mxu0 0.0
        %452 = vmatpush1.msra.mxu0 0.0
        %453 = vmatprep.mubr.f32.mxu0 0.0
        %454 = vmatmul.mubr.f32.gmra.mrb[0].mxu0 %v387
        %v455 = vpop.f32.mrb[0].mxu0
        %v456 = vadd.f32 0.0, %v455
        %v457 = vpop.f32.mrb[0].mxu0
        %458 = vdwg.mxu0
        %v460 = vrot.slane %v456, 1
        %v462 = vadd.f32 %v456, %v460
        %v463 = vsub.f32 0.0, %v462
        %v464 = vmul.f32 %v463, 1.442695
        %v465 = vpow.pop %v464
        %v466 = vadd.f32 %v465, 1.0
        %v467 = vrcp.pop %v466
        %v468 = vmul.f32 1.0, %v467
        %469 = vst [vmem:[%s187] sm:$0x1] %v468
        %s470 = sand.u32 %s96, 1
        %s471 = scalar_lea.sflag [#allocation4], %s470
        %s472 = sand.u32 %s96, 1
        %s473 = scalar_lea.vmem [#allocation5], %s472
        // Predicated region
        $region37: #{channel_attention.1} parent=31 // pred_check
          %p474 = pneg %p106
        $region38: #{channel_attention.1} parent=31 // pred_check_branch
          %476 = sbr.rel (%p474) target = $region40
        $region39: #{channel_attention.1} parent=31 // pred_region
          %s478 = ssub.s32 16, 16
          %479 = vsyncadd %s471, %s478
          %s480 = smul.addr %s20, 16
          %s481 = scalar_lea.hbm %s3, %s480
          %s483 = sshll.u32 %s473, 4
          %s484 = int_to_ptr.vmem [resolvable:$true] %s483
          %486 = dma.vmem_to_hbm [thread:$0]  %s484, 16, %s481, %s471
        $region40: #{channel_attention.1} parent=31 // pred_fallthru
          _
      $region32: #{channel_attention.1} parent=5 // pred_fallthru
        _
      %p487 = scmp.le.s32.totalorder 2, %s15
      // Predicated region
      $region41: #{channel_attention.1} parent=5 // pred_check
        %p488 = pneg %p487
      $region42: #{channel_attention.1} parent=5 // pred_check_branch
        %490 = sbr.rel (%p488) target = $region44
      $region43: #{channel_attention.1} parent=5 // pred_region
        %s491 = ssub.s32 %s15, 2
        // Predicated region
        $region45: #{channel_attention.1} parent=43 // pred_check
          %p492 = pneg %p112
        $region46: #{channel_attention.1} parent=43 // pred_check_branch
          %494 = sbr.rel (%p492) target = $region48
        $region47: #{channel_attention.1} parent=43 // pred_region
          %s495 = sand.u32 %s97, 1
          %s496 = scalar_lea.sflag [#allocation4], %s495
          %s497 = sand.u32 %s97, 1
          %s498 = scalar_lea.vmem [#allocation5], %s497
          %499 = dma.done %s496, 16
        $region48: #{channel_attention.1} parent=43 // pred_fallthru
          _
      $region44: #{channel_attention.1} parent=5 // pred_fallthru
        _
    $region6: #{channel_attention.1} parent=1 // loop_footer
      %s19 = sadd.s32 1, %s15
    $region7: #{channel_attention.1} parent=1 // loop_footer_branch
      %14 = sbr.rel target = $region3
    $region8: #{channel_attention.1} parent=1 // loop_exit
      _
    %500 = vsyncpa [#allocation3], 1
    %s501 = scalar_lea.sflag [#allocation3], 1
    %502 = vsyncpa %s501, 1
    %503 = vsyncpa [#allocation4], 1
    %s504 = scalar_lea.sflag [#allocation4], 1
    %505 = vsyncpa %s504, 1

</llo_original>
